<compile_context>
chip_gen: v5e
topology: v5e:2x2
jax: 0.10.0
libtpu: 0.0.40
codegen_flags: <defaults>
</compile_context>

<pallas_src>
import jax
import jax.numpy as jnp
from jax.experimental import pallas as pl
from jax.experimental.pallas import tpu as pltpu


# ----------------------------------------------------------------------------
# VMEM budgeting helpers
# ----------------------------------------------------------------------------
_VMEM_FALLBACK_BYTES = 64 * 1024 * 1024      # v7x floor (smallest per-core VMEM)


def _vmem_capacity_bytes():
    """Per-core VMEM capacity; conservative fallback if the query fails."""
    try:
        cap = int(getattr(pltpu.get_tpu_info(), "vmem_capacity_bytes", 0))
        if cap > 0:
            return min(max(cap, 32 * 1024 * 1024), 256 * 1024 * 1024)
    except Exception:
        pass
    return _VMEM_FALLBACK_BYTES


def _vmem_limit_bytes(cap):
    # Raise the scoped-VMEM limit explicitly (defaults are only 16/32 MiB),
    # leaving headroom for compiler-internal scratch.
    return int(cap * 0.85)


def _round_up(n, m):
    return ((n + m - 1) // m) * m


def _choose_tile_bc(bc, row_lane_elems, itemsize, vmem_cap, resident_bytes=0):
    """Largest B*C tile whose double-buffered blocks fit the VMEM budget.

    `row_lane_elems` = total lane elements per bc-row over all bc-tiled
    inputs + outputs.  Budget ~40% of per-core VMEM minus resident constants
    (headroom for compiler scratch).  Capped so the grid keeps >= 2 blocks
    whenever possible (keeps both v7x TensorCores working).
    """
    bytes_per_row = 2 * row_lane_elems * max(int(itemsize), 4)   # 2x: double buffering
    budget = max(int(vmem_cap * 0.4) - int(resident_bytes), 1 << 20)
    tile = max(budget // max(bytes_per_row, 1), 8)
    if bc > 8:
        tile = min(tile, _round_up((bc + 1) // 2, 8))
    if tile >= bc:
        return bc
    return max(8, (tile // 8) * 8)


def _fused_fits(C, H, W, itemsize, cap):
    """Can a whole per-batch slab (plus constants/temps) live in VMEM?"""
    HW = H * W
    f32 = 4
    slab_io = C * HW * max(int(itemsize), f32)          # one x block / one out block
    consts = 2 * (H + W) * HW * f32                     # pool matrix + eh + ew
    temps = 3 * C * HW * f32                            # x_f32, sh, sw intermediates
    need = 4 * slab_io + consts + temps + (2 << 20)
    return need <= int(cap * 0.8)


# ----------------------------------------------------------------------------
# Constant matrices (built in the wrapper, resident in VMEM inside kernels)
# ----------------------------------------------------------------------------
def _coord_pool_matrix(H, W):
    """(H*W, H+W): cols [0,H) = mean over W per row h; cols [H,H+W) = mean over H per col w."""
    ph = jnp.repeat(jnp.eye(H, dtype=jnp.float32), W, axis=0) / float(W)   # (H*W, H)
    pw = jnp.tile(jnp.eye(W, dtype=jnp.float32), (H, 1)) / float(H)        # (H*W, W)
    return jnp.concatenate([ph, pw], axis=1)


def _expand_matrices(H, W):
    """One-hot expansion matrices: (H, H*W) and (W, H*W)."""
    eh = jnp.repeat(jnp.eye(H, dtype=jnp.float32), W, axis=1)    # eh[h, h*W+w] = 1
    ew = jnp.tile(jnp.eye(W, dtype=jnp.float32), (1, H))         # ew[w, h*W+w] = 1
    return eh, ew


def _pooling_matrix(H, W, oh, ow):
    """(H*W, oh*ow) matrix implementing AvgPool2d with the module's derived
    kernel/stride (kernel = in - (out-1)*stride, stride = in // out)."""
    sh, sw = H // oh, W // ow
    kh, kw = H - (oh - 1) * sh, W - (ow - 1) * sw
    h_idx = jnp.arange(H)[:, None]
    w_idx = jnp.arange(W)[:, None]
    oh_idx = jnp.arange(oh)[None, :]
    ow_idx = jnp.arange(ow)[None, :]
    in_h = (h_idx >= oh_idx * sh) & (h_idx < oh_idx * sh + kh)        # (H, oh)
    in_w = (w_idx >= ow_idx * sw) & (w_idx < ow_idx * sw + kw)        # (W, ow)
    m = in_h[:, None, :, None] & in_w[None, :, None, :]               # (H, W, oh, ow)
    return m.reshape(H * W, oh * ow).astype(jnp.float32) / float(kh * kw)


def _resolve_output_size(output_size, H, W):
    defaults = (H, W)
    sizes = tuple(int(v) if v is not None else int(d)
                  for v, d in zip(output_size, defaults[-len(output_size):]))
    if len(sizes) == 1:
        return H, sizes[0]
    return sizes


# ----------------------------------------------------------------------------
# Standalone pooling (AdaptiveAvgPool2dCustom) as a lane-dense matmul
# ----------------------------------------------------------------------------
def _pool_kernel(x_ref, p_ref, o_ref):
    o_ref[...] = jnp.dot(x_ref[...].astype(jnp.float32), p_ref[...],
                         preferred_element_type=jnp.float32).astype(o_ref.dtype)


def _pool_matmul(x2d, pool_mat, vmem_cap):
    bc, lane_in = x2d.shape
    lane_out = pool_mat.shape[1]
    resident = lane_in * lane_out * 4
    tile_bc = _choose_tile_bc(bc, lane_in + lane_out, x2d.dtype.itemsize,
                              vmem_cap, resident)
    grid = (pl.cdiv(bc, tile_bc),)
    return pl.pallas_call(
        _pool_kernel,
        out_shape=jax.ShapeDtypeStruct((bc, lane_out), x2d.dtype),
        grid=grid,
        in_specs=[pl.BlockSpec((tile_bc, lane_in), lambda i: (i, 0)),
                  pl.BlockSpec((lane_in, lane_out), lambda i: (0, 0))],
        out_specs=pl.BlockSpec((tile_bc, lane_out), lambda i: (i, 0)),
        compiler_params=pltpu.CompilerParams(
            dimension_semantics=("parallel",),
            vmem_limit_bytes=_vmem_limit_bytes(vmem_cap)),
    )(x2d, pool_mat)


def adaptive_avg_pool2d_custom(x, output_size):
    """AdaptiveAvgPool2dCustom.forward.  x: (B, C, H, W) -> (B, C, oh, ow)."""
    B, C, H, W = x.shape
    oh, ow = _resolve_output_size(output_size, H, W)
    pool_mat = _pooling_matrix(H, W, oh, ow)
    out2d = _pool_matmul(x.reshape(B * C, H * W), pool_mat, _vmem_capacity_bytes())
    return out2d.reshape(B, C, oh, ow)


# ----------------------------------------------------------------------------
# PRIMARY: fully fused CoordAtt kernel (one pass over x, grid over batch)
# ----------------------------------------------------------------------------
def _coordatt_fused_kernel(x_ref, p_ref, w1_ref, b1_ref, wh_ref, bh_ref,
                           ww_ref, bw_ref, eh_ref, ew_ref, o_ref):
    H = eh_ref.shape[0]
    x = x_ref[0].astype(jnp.float32)                                    # (C, H*W)
    # Fused H-pool + W-pool in one MXU matmul (x read from HBM once total).
    y = jnp.dot(x, p_ref[...], preferred_element_type=jnp.float32)      # (C, H+W)
    # conv1 (1x1) with inference-mode BatchNorm folded in, then h_swish.
    h = jnp.dot(w1_ref[...], y, preferred_element_type=jnp.float32) + b1_ref[...]
    h = h * (jnp.clip(h + 3.0, 0.0, 6.0) * (1.0 / 6.0))                 # h_swish
    # conv_h / conv_w (1x1) + sigmoid -> per-(c,h) and per-(c,w) gates.
    zh = jnp.dot(wh_ref[...], h[:, :H], preferred_element_type=jnp.float32) + bh_ref[...]
    zw = jnp.dot(ww_ref[...], h[:, H:], preferred_element_type=jnp.float32) + bw_ref[...]
    a_h = 1.0 / (1.0 + jnp.exp(-zh))                                    # (C, H)
    a_w = 1.0 / (1.0 + jnp.exp(-zw))                                    # (C, W)
    # Broadcast gates to H*W lanes via constant one-hot matrices (idle MXU)
    # so the full-tensor read/modify/write stays lane-dense.
    sh = jnp.dot(a_h, eh_ref[...], preferred_element_type=jnp.float32)  # (C, H*W)
    sw = jnp.dot(a_w, ew_ref[...], preferred_element_type=jnp.float32)  # (C, H*W)
    o_ref[0] = (x * sh * sw).astype(o_ref.dtype)


def _coordatt_fused(x3d, pool_mat, w1f, b1f, wh, bh, ww, bw, eh, ew, cap):
    B, C, HW = x3d.shape
    H = eh.shape[0]
    W = ew.shape[0]
    mip = w1f.shape[0]
    return pl.pallas_call(
        _coordatt_fused_kernel,
        out_shape=jax.ShapeDtypeStruct((B, C, HW), x3d.dtype),
        grid=(B,),
        in_specs=[
            pl.BlockSpec((1, C, HW), lambda b: (b, 0, 0)),
            pl.BlockSpec((HW, H + W), lambda b: (0, 0)),
            pl.BlockSpec((mip, C), lambda b: (0, 0)),
            pl.BlockSpec((mip, 1), lambda b: (0, 0)),
            pl.BlockSpec((C, mip), lambda b: (0, 0)),
            pl.BlockSpec((C, 1), lambda b: (0, 0)),
            pl.BlockSpec((C, mip), lambda b: (0, 0)),
            pl.BlockSpec((C, 1), lambda b: (0, 0)),
            pl.BlockSpec((H, HW), lambda b: (0, 0)),
            pl.BlockSpec((W, HW), lambda b: (0, 0)),
        ],
        out_specs=pl.BlockSpec((1, C, HW), lambda b: (b, 0, 0)),
        compiler_params=pltpu.CompilerParams(
            dimension_semantics=("parallel",),
            vmem_limit_bytes=_vmem_limit_bytes(cap)),
    )(x3d, pool_mat, w1f, b1f, wh, bh, ww, bw, eh, ew)


# ----------------------------------------------------------------------------
# FALLBACK split path (very large per-batch slabs): gates + apply kernels
# ----------------------------------------------------------------------------
def _gates_kernel(yh_ref, yw_ref, w1_ref, b1_ref, wh_ref, bh_ref, ww_ref, bw_ref,
                  ah_ref, aw_ref):
    def head(y, w_out, b_out):
        h = jnp.dot(w1_ref[...], y, preferred_element_type=jnp.float32) + b1_ref[...]
        h = h * (jnp.clip(h + 3.0, 0.0, 6.0) * (1.0 / 6.0))           # h_swish
        z = jnp.dot(w_out, h, preferred_element_type=jnp.float32) + b_out
        return 1.0 / (1.0 + jnp.exp(-z))                               # sigmoid

    ah_ref[0] = head(yh_ref[0].astype(jnp.float32), wh_ref[...], bh_ref[...]).astype(ah_ref.dtype)
    aw_ref[0] = head(yw_ref[0].astype(jnp.float32), ww_ref[...], bw_ref[...]).astype(aw_ref.dtype)


def _coord_gates(yh, yw, w1f, b1f, wh, bh, ww, bw):
    B, C, H = yh.shape
    W = yw.shape[2]
    mip = w1f.shape[0]
    Cout = wh.shape[0]
    return pl.pallas_call(
        _gates_kernel,
        out_shape=(jax.ShapeDtypeStruct((B, Cout, H), jnp.float32),
                   jax.ShapeDtypeStruct((B, Cout, W), jnp.float32)),
        grid=(B,),
        in_specs=[
            pl.BlockSpec((1, C, H), lambda b: (b, 0, 0)),
            pl.BlockSpec((1, C, W), lambda b: (b, 0, 0)),
            pl.BlockSpec((mip, C), lambda b: (0, 0)),
            pl.BlockSpec((mip, 1), lambda b: (0, 0)),
            pl.BlockSpec((Cout, mip), lambda b: (0, 0)),
            pl.BlockSpec((Cout, 1), lambda b: (0, 0)),
            pl.BlockSpec((Cout, mip), lambda b: (0, 0)),
            pl.BlockSpec((Cout, 1), lambda b: (0, 0)),
        ],
        out_specs=(pl.BlockSpec((1, Cout, H), lambda b: (b, 0, 0)),
                   pl.BlockSpec((1, Cout, W), lambda b: (b, 0, 0))),
        compiler_params=pltpu.CompilerParams(dimension_semantics=("parallel",)),
    )(yh, yw, w1f, b1f, wh, bh, ww, bw)


def _apply_kernel(x_ref, ah_ref, aw_ref, eh_ref, ew_ref, o_ref):
    sh = jnp.dot(ah_ref[...].astype(jnp.float32), eh_ref[...],
                 preferred_element_type=jnp.float32)                   # (tile_bc, H*W)
    sw = jnp.dot(aw_ref[...].astype(jnp.float32), ew_ref[...],
                 preferred_element_type=jnp.float32)                   # (tile_bc, H*W)
    o_ref[...] = (x_ref[...].astype(jnp.float32) * sh * sw).astype(o_ref.dtype)


def _apply_gates(x2d, ah2d, aw2d, H, W, eh, ew, vmem_cap):
    bc, HW = x2d.shape
    resident = (H + W) * HW * 4
    tile_bc = _choose_tile_bc(bc, 2 * HW + H + W, x2d.dtype.itemsize,
                              vmem_cap, resident)
    grid = (pl.cdiv(bc, tile_bc),)
    return pl.pallas_call(
        _apply_kernel,
        out_shape=jax.ShapeDtypeStruct((bc, HW), x2d.dtype),
        grid=grid,
        in_specs=[
            pl.BlockSpec((tile_bc, HW), lambda i: (i, 0)),
            pl.BlockSpec((tile_bc, H), lambda i: (i, 0)),
            pl.BlockSpec((tile_bc, W), lambda i: (i, 0)),
            pl.BlockSpec((H, HW), lambda i: (0, 0)),
            pl.BlockSpec((W, HW), lambda i: (0, 0)),
        ],
        out_specs=pl.BlockSpec((tile_bc, HW), lambda i: (i, 0)),
        compiler_params=pltpu.CompilerParams(
            dimension_semantics=("parallel",),
            vmem_limit_bytes=_vmem_limit_bytes(vmem_cap)),
    )(x2d, ah2d, aw2d, eh, ew)


# ----------------------------------------------------------------------------
# Full CoordAtt forward
# ----------------------------------------------------------------------------
def _fold_bn(params):
    eps = params.get("eps", 1e-5)
    mip = params["w1"].shape[0]
    scale = params["gamma"] / jnp.sqrt(params["var"] + eps)
    w1f = (params["w1"] * scale[:, None]).astype(jnp.float32)
    b1f = ((params["b1"] - params["mean"]) * scale + params["beta"]).astype(jnp.float32)
    return w1f, b1f.reshape(mip, 1)


def coord_att(x, params, force_split=False):
    """CoordAtt.forward (inference).  x: (B, C, H, W) NCHW, float."""
    B, C, H, W = x.shape
    mip, Cin = params["w1"].shape
    Cout = params["wh"].shape[0]
    if Cin != C or Cout != C:
        raise ValueError("CoordAtt requires in_channels == out_channels == C")

    cap = _vmem_capacity_bytes()
    HW = H * W

    w1f, b1f = _fold_bn(params)
    wh = params["wh"].astype(jnp.float32)
    bh = params["bh"].reshape(Cout, 1).astype(jnp.float32)
    ww = params["ww"].astype(jnp.float32)
    bw = params["bw"].reshape(Cout, 1).astype(jnp.float32)
    pool_mat = _coord_pool_matrix(H, W)
    eh, ew = _expand_matrices(H, W)

    # ---- Primary: fully fused (x read once, written once) -------------------
    if (not force_split) and _fused_fits(C, H, W, x.dtype.itemsize, cap):
        out3d = _coordatt_fused(x.reshape(B, C, HW), pool_mat,
                                w1f, b1f, wh, bh, ww, bw, eh, ew, cap)
        return out3d.reshape(B, C, H, W)

    # ---- Fallback: split 3-kernel pipeline (tiles B*C) ----------------------
    x2d = x.reshape(B * C, HW)
    y0 = _pool_matmul(x2d, pool_mat, cap).reshape(B, C, H + W)
    yh = y0[:, :, :H]                                                  # pool_h
    yw = y0[:, :, H:]                                                  # pool_w
    a_h, a_w = _coord_gates(yh, yw, w1f, b1f, wh, bh, ww, bw)
    out2d = _apply_gates(x2d, a_h.reshape(B * Cout, H), a_w.reshape(B * Cout, W),
                         H, W, eh, ew, cap)
    return out2d.reshape(B, C, H, W)


# ----------------------------------------------------------------------------
# Pure-jnp references
# ----------------------------------------------------------------------------
def _pool_reference(x, output_size):
    B, C, H, W = x.shape
    oh, ow = _resolve_output_size(output_size, H, W)
    sh, sw = H // oh, W // ow
    kh, kw = H - (oh - 1) * sh, W - (ow - 1) * sw
    rows = []
    for i in range(oh):
        cols = []
        for j in range(ow):
            win = x[:, :, i * sh:i * sh + kh, j * sw:j * sw + kw]
            cols.append(jnp.mean(win, axis=(2, 3)))
        rows.append(jnp.stack(cols, axis=-1))
    return jnp.stack(rows, axis=2)


def _coordatt_reference(x, params):
    eps = params.get("eps", 1e-5)
    B, C, H, W = x.shape
    xh = jnp.mean(x, axis=3)                                          # (B, C, H)
    xw = jnp.mean(x, axis=2)                                          # (B, C, W)
    y = jnp.concatenate([xh, xw], axis=2)                             # (B, C, H+W)
    h = jnp.einsum("mc,bcl->bml", params["w1"], y) + params["b1"][None, :, None]
    h = (h - params["mean"][None, :, None]) / jnp.sqrt(params["var"] + eps)[None, :, None]
    h = h * params["gamma"][None, :, None] + params["beta"][None, :, None]
    h = h * jnp.clip(h + 3.0, 0.0, 6.0) / 6.0                         # h_swish
    ah = jax.nn.sigmoid(jnp.einsum("om,bml->bol", params["wh"], h[:, :, :H])
                        + params["bh"][None, :, None])                # (B, C, H)
    aw = jax.nn.sigmoid(jnp.einsum("om,bml->bol", params["ww"], h[:, :, H:])
                        + params["bw"][None, :, None])                # (B, C, W)
    return x * aw[:, :, None, :] * ah[:, :, :, None]


# ----------------------------------------------------------------------------
# Self-test
# ----------------------------------------------------------------------------
if __name__ == "__main__":
    keys = jax.random.split(jax.random.PRNGKey(0), 12)
    x = jax.random.normal(keys[0], (2, 4, 16, 16), dtype=jnp.float32)
    x_ragged = jax.random.normal(keys[11], (3, 5, 16, 16), dtype=jnp.float32)  # bc=15: ragged tiles

    ok = True

    # Pooling: the two CoordAtt cases, one general case, and a non-divisible bc.
    # Tolerance sized for worst-case MXU default-precision (bf16-pass) matmuls.
    for xt, osz in [(x, (None, 1)), (x, (1, None)), (x, (4, 8)), (x_ragged, (None, 1))]:
        got = jax.block_until_ready(adaptive_avg_pool2d_custom(xt, osz))
        want = _pool_reference(xt, osz)
        ok = ok and (got.shape == want.shape)
        ok = ok and bool(jnp.allclose(got, want, atol=2e-3, rtol=2e-3))

    # Full CoordAtt forward: in_channels = out_channels = 4, reduction 32 -> mip = 8.
    C, Cout = 4, 4
    mip = max(8, C // 32)
    params = {
        "w1":    0.4 * jax.random.normal(keys[1], (mip, C), jnp.float32),
        "b1":    0.1 * jax.random.normal(keys[2], (mip,), jnp.float32),
        "gamma": 1.0 + 0.1 * jax.random.normal(keys[3], (mip,), jnp.float32),
        "beta":  0.1 * jax.random.normal(keys[4], (mip,), jnp.float32),
        "mean":  0.1 * jax.random.normal(keys[5], (mip,), jnp.float32),
        "var":   0.5 + jnp.abs(jax.random.normal(keys[6], (mip,), jnp.float32)),
        "wh":    0.4 * jax.random.normal(keys[7], (Cout, mip), jnp.float32),
        "bh":    0.1 * jax.random.normal(keys[8], (Cout,), jnp.float32),
        "ww":    0.4 * jax.random.normal(keys[9], (Cout, mip), jnp.float32),
        "bw":    0.1 * jax.random.normal(keys[10], (Cout,), jnp.float32),
        "eps":   1e-5,
    }
    want = _coordatt_reference(x, params)
    # Exercise both the fused (primary) and split (fallback) code paths.
    for force_split in (False, True):
        got = jax.block_until_ready(coord_att(x, params, force_split=force_split))
        ok = ok and (got.shape == want.shape)
        ok = ok and bool(jnp.allclose(got, want, atol=3e-2, rtol=3e-2))

    print("KERNEL_OK" if ok else "KERNEL_MISMATCH")
</pallas_src>

<mosaic_0001>
module attributes {stable_mosaic.version = 11 : i64} {
  func.func @_pool_kernel(%arg0: i32, %arg1: memref<8x256xf32, #tpu.memory_space<vmem>>, %arg2: memref<256x16xf32, #tpu.memory_space<vmem>>, %arg3: memref<8x16xf32, #tpu.memory_space<vmem>>) attributes {dimension_semantics = [#tpu.dimension_semantics<parallel>], iteration_bounds = array<i64: 1>, scalar_prefetch = 0 : i64, scratch_operands = 0 : i64, tpu.core_type = #tpu.core_type<tc>, window_params = [{transform_indices = @transform_0, window_bounds = array<i64: 8, 256>}, {pipeline_mode = #tpu.pipeline_mode<synchronous>, transform_indices = @transform_1, window_bounds = array<i64: 256, 16>}, {transform_indices = @transform_2, window_bounds = array<i64: 8, 16>}]} {
    %c0 = arith.constant 0 : index
    %c0_0 = arith.constant 0 : index
    %0 = vector.load %arg1[%c0, %c0_0] : memref<8x256xf32, #tpu.memory_space<vmem>>, vector<8x256xf32>
    %c0_1 = arith.constant 0 : index
    %c0_2 = arith.constant 0 : index
    %1 = vector.load %arg2[%c0_1, %c0_2] : memref<256x16xf32, #tpu.memory_space<vmem>>, vector<256x16xf32>
    %cst = arith.constant dense<0.000000e+00> : vector<8x16xf32>
    %2 = tpu.matmul %0, %1, %cst {dimension_numbers = #tpu.dot_dimension_numbers<[1], [0], [0], [1], [0, 0, 1, 1], [], []>} : vector<8x256xf32>, vector<256x16xf32>, vector<8x16xf32> -> vector<8x16xf32>
    %c0_3 = arith.constant 0 : index
    %c0_4 = arith.constant 0 : index
    %3 = vector.load %arg3[%c0_3, %c0_4] : memref<8x16xf32, #tpu.memory_space<vmem>>, vector<8x16xf32>
    tpu.vector_store %arg3[%c0_3, %c0_4], %2 {strides = array<i32>} : memref<8x16xf32, #tpu.memory_space<vmem>>, vector<8x16xf32>,
    return
  }
  func.func @transform_0(%arg0: i32) -> (i32, i32) {
    %c0_i32 = arith.constant 0 : i32
    %c0_i32_0 = arith.constant 0 : i32
    return %arg0, %c0_i32 : i32, i32
  }
  func.func @transform_1(%arg0: i32) -> (i32, i32) {
    %c0_i32 = arith.constant 0 : i32
    %c0_i32_0 = arith.constant 0 : i32
    %c0_i32_1 = arith.constant 0 : i32
    return %c0_i32, %c0_i32_0 : i32, i32
  }
  func.func @transform_2(%arg0: i32) -> (i32, i32) {
    %c0_i32 = arith.constant 0 : i32
    %c0_i32_0 = arith.constant 0 : i32
    return %arg0, %c0_i32 : i32, i32
  }
}

</mosaic_0001>

<llo_original>
// kernel: tpu_custom_call.1
$region0: #{tpu_custom_call.1}
  #allocation0 [shape = 'u32[]', space=smem, size = 0x4, offset = 0x4, fixed_abs, tag = 'smem constant byte address 0x4 - core index']
  #allocation1 [shape = 'u32[72,128]{1,0:T(1,128)}', space=vmem, size = 0x9000, scoped, tag = 'internal scratch']
  %s0 = inlined_call_operand.vmem [shape: f32[8,256], index: 0, kind: input, shape index: {}]
  %s1 = inlined_call_operand.vmem [shape: f32[256,16], index: 1, kind: input, shape index: {}]
  %s2 = inlined_call_operand.hbm [shape: f32[8,16], index: 2, kind: output, shape index: {}]
  %s3 = sld [smem:[#allocation0]]
  $region18: #{tpu_custom_call.1} parent=0
    _
  %s5 = ssub.s32 1, %s3
  %s6 = scalar_select 0, %s5, %s3
  $region1: #{tpu_custom_call.1} parent=0
    #allocation2 [shape = 'u8[4096]{0}', space=vmem, size = 0x1000, scoped, tag = 'output window, operand 0, single buffered']
    #allocation3 [shape = 's32[1]{0}', space=sflag, size = 0x4, scoped, tag = 'scoped memory for tpu_custom_call.1']
    %7 = vsyncpa [#allocation3], 0
    // Predicated region
    $region2: #{tpu_custom_call.1} parent=1 // pred_check
      _
    $region3: #{tpu_custom_call.1} parent=1 // pred_check_branch
      %9 = sbr.rel (0) target = $region5
    $region4: #{tpu_custom_call.1} parent=1 // pred_region
      _
    $region5: #{tpu_custom_call.1} parent=1 // pred_fallthru
      _
    // Predicated region
    $region6: #{tpu_custom_call.1} parent=1 // pred_check
      _
    $region7: #{tpu_custom_call.1} parent=1 // pred_check_branch
      %11 = sbr.rel (0) target = $region9
    $region8: #{tpu_custom_call.1} parent=1 // pred_region
      _
    $region9: #{tpu_custom_call.1} parent=1 // pred_fallthru
      _
    %v12 = vld [vmem:[%s0] sm:$0xff]
    %v13 = vld [vmem:[%s0 + $0x8] sm:$0xff]
    %v14 = vld [vmem:[%s1] sm:$0xff]
    %v15 = vld [vmem:[%s1 + $0x8] sm:$0xff]
    %v16 = vld [vmem:[%s1 + $0x10] sm:$0xff]
    %v17 = vld [vmem:[%s1 + $0x18] sm:$0xff]
    %v18 = vld [vmem:[%s1 + $0x20] sm:$0xff]
    %v19 = vld [vmem:[%s1 + $0x28] sm:$0xff]
    %v20 = vld [vmem:[%s1 + $0x30] sm:$0xff]
    %v21 = vld [vmem:[%s1 + $0x38] sm:$0xff]
    %v22 = vld [vmem:[%s1 + $0x40] sm:$0xff]
    %v23 = vld [vmem:[%s1 + $0x48] sm:$0xff]
    %v24 = vld [vmem:[%s1 + $0x50] sm:$0xff]
    %v25 = vld [vmem:[%s1 + $0x58] sm:$0xff]
    %v26 = vld [vmem:[%s1 + $0x60] sm:$0xff]
    %v27 = vld [vmem:[%s1 + $0x68] sm:$0xff]
    %v28 = vld [vmem:[%s1 + $0x70] sm:$0xff]
    %v29 = vld [vmem:[%s1 + $0x78] sm:$0xff]
    %v30 = vld [vmem:[%s1 + $0x80] sm:$0xff]
    %v31 = vld [vmem:[%s1 + $0x88] sm:$0xff]
    %v32 = vld [vmem:[%s1 + $0x90] sm:$0xff]
    %v33 = vld [vmem:[%s1 + $0x98] sm:$0xff]
    %v34 = vld [vmem:[%s1 + $0xa0] sm:$0xff]
    %v35 = vld [vmem:[%s1 + $0xa8] sm:$0xff]
    %v36 = vld [vmem:[%s1 + $0xb0] sm:$0xff]
    %v37 = vld [vmem:[%s1 + $0xb8] sm:$0xff]
    %v38 = vld [vmem:[%s1 + $0xc0] sm:$0xff]
    %v39 = vld [vmem:[%s1 + $0xc8] sm:$0xff]
    %v40 = vld [vmem:[%s1 + $0xd0] sm:$0xff]
    %v41 = vld [vmem:[%s1 + $0xd8] sm:$0xff]
    %v42 = vld [vmem:[%s1 + $0xe0] sm:$0xff]
    %v43 = vld [vmem:[%s1 + $0xe8] sm:$0xff]
    %v44 = vld [vmem:[%s1 + $0xf0] sm:$0xff]
    %v45 = vld [vmem:[%s1 + $0xf8] sm:$0xff]
    %46 = vmatpush.msra.mxu0 %v29
    %47 = vmatpush.msra.mxu0 %v28
    %48 = vmatpush.msra.mxu0 %v27
    %49 = vmatpush.msra.mxu0 %v26
    %50 = vmatpush.msra.mxu0 %v25
    %51 = vmatpush.msra.mxu0 %v24
    %52 = vmatpush.msra.mxu0 %v23
    %53 = vmatpush.msra.mxu0 %v22
    %54 = vmatpush.msra.mxu0 %v21
    %55 = vmatpush.msra.mxu0 %v20
    %56 = vmatpush.msra.mxu0 %v19
    %57 = vmatpush.msra.mxu0 %v18
    %58 = vmatpush.msra.mxu0 %v17
    %59 = vmatpush.msra.mxu0 %v16
    %60 = vmatpush.msra.mxu0 %v15
    %61 = vmatpush.msra.mxu0 %v14
    %62 = vmatmul.f32.gmra.mxu0 %v12
    %v63 = vpop.f32.mrf.mxu0
    %v64 = vadd.f32 0.0, %v63
    %65 = vdwg.mxu0
    %66 = vmatpush.msra.mxu0 %v45
    %67 = vmatpush.msra.mxu0 %v44
    %68 = vmatpush.msra.mxu0 %v43
    %69 = vmatpush.msra.mxu0 %v42
    %70 = vmatpush.msra.mxu0 %v41
    %71 = vmatpush.msra.mxu0 %v40
    %72 = vmatpush.msra.mxu0 %v39
    %73 = vmatpush.msra.mxu0 %v38
    %74 = vmatpush.msra.mxu0 %v37
    %75 = vmatpush.msra.mxu0 %v36
    %76 = vmatpush.msra.mxu0 %v35
    %77 = vmatpush.msra.mxu0 %v34
    %78 = vmatpush.msra.mxu0 %v33
    %79 = vmatpush.msra.mxu0 %v32
    %80 = vmatpush.msra.mxu0 %v31
    %81 = vmatpush.msra.mxu0 %v30
    %82 = vmatmul.f32.gmra.mxu0 %v13
    %v83 = vpop.f32.mrf.mxu0
    %v84 = vadd.f32 %v64, %v83
    %85 = vdwg.mxu0
    %vm86 = vcmask 130048
    %87 = vst.msk [vmem:[#allocation2] sm:$0xff] %vm86, %v84
    // Predicated region
    $region10: #{tpu_custom_call.1} parent=1 // pred_check
      _
    $region11: #{tpu_custom_call.1} parent=1 // pred_check_branch
      %89 = sbr.rel (0) target = $region13
    $region12: #{tpu_custom_call.1} parent=1 // pred_region
      %91 = vsyncadd [#allocation3], 0
      %s93 = sshll.u32 [#allocation2], 4
      %s94 = int_to_ptr.vmem [resolvable:$true] %s93
      %s95 = sshll.u32 %s2, 4
      %s96 = int_to_ptr.hbm [resolvable:$true] %s95
      %98 = dma.vmem_to_hbm [thread:$0]  %s94, 128, %s96, [#allocation3]
    $region13: #{tpu_custom_call.1} parent=1 // pred_fallthru
      _
    // Predicated region
    $region14: #{tpu_custom_call.1} parent=1 // pred_check
      _
    $region15: #{tpu_custom_call.1} parent=1 // pred_check_branch
      %100 = sbr.rel (0) target = $region17
    $region16: #{tpu_custom_call.1} parent=1 // pred_region
      %102 = dma.done [#allocation3], 128
    $region17: #{tpu_custom_call.1} parent=1 // pred_fallthru
      _
    %103 = vsyncpa [#allocation3], 1

</llo_original>
